<compile_context>
chip_gen: v7x
topology: tpu7x:2x2x1
jax: 0.10.0
libtpu: 0.0.40
codegen_flags: <defaults>
</compile_context>

<pallas_src>
import math
from functools import partial

import jax
import jax.numpy as jnp
from jax import lax
from jax.experimental import pallas as pl
from jax.experimental.pallas import tpu as pltpu


def _round_up(x, m):
    return ((x + m - 1) // m) * m


def _tpu_vmem_capacity():
    """Physical VMEM bytes for the local TPU generation (fallback: v7x 64 MiB)."""
    try:
        info = pltpu.get_tpu_info()
        cap = getattr(info, "vmem_capacity_bytes", None)
        if cap:
            return int(cap)
    except Exception:
        pass
    return 64 * 1024 * 1024


def _choose_tile(lout2, cin_p, cmid_p, cout_p, k1, k2, batch, halo_blk, max_tile,
                 vmem_cap):
    """Pick the conv2-output length tile (lane axis). Returns (tl, lpad, nt)."""
    # Generation-aware budget: <=40 MiB and <= 1/3 of physical VMEM
    # (v7x: 64 MiB physical -> ~21 MiB budget; v5e/v6e: 128 MiB -> 40 MiB).
    budget = min(40 << 20, max(8 << 20, vmem_cap // 3))
    # Approx bytes needed per output-lane column:
    #  x blocks (bf16, double buffered) + bf16 tap-stacked x value      : cin_p*(4+2*k1)
    #  f32 y1 value + bf16 tap-stacked y1 value                         : cmid_p*(6+2*k2)
    #  f32 out value + double-buffered f32 out block                    : cout_p*12
    per_col = cin_p * (4 + 2 * k1) + cmid_p * (6 + 2 * k2) + 12 * cout_p
    fixed = (4 * (cmid_p * k1 * cin_p + cout_p * k2 * cmid_p)   # weights (x2 buffers, bf16)
             + 4 * cin_p * halo_blk                              # halo blocks
             + (2 << 20))                                        # slack / compiler scratch
    tl = max(halo_blk, (budget - fixed) // max(per_col, 1))
    tl = min(tl, max(halo_blk, max_tile), _round_up(lout2, halo_blk))
    tl = max(halo_blk, (tl // halo_blk) * halo_blk)
    lpad = _round_up(lout2, tl)
    nt = lpad // tl
    # Keep both v7x TensorCores busy: guarantee >=2 parallel grid steps.
    if batch * nt < 2 and lout2 > halo_blk:
        tl = _round_up(-(-lout2 // 2), halo_blk)
        lpad = _round_up(lout2, tl)
        nt = lpad // tl
    return tl, lpad, nt


def _fused_convblock_kernel(x_ref, xh_ref, w1_ref, b1_ref, w2_ref, b2_ref, o_ref,
                            *, k1, k2, p2, lout1, tl, slope):
    """One (batch, L-tile) block of Conv1d -> LReLU -> Conv1d -> LReLU.

    x_ref : (1, Cin_p, tl)        main input tile (bf16, lane-dense)
    xh_ref: (1, Cin_p, halo_blk)  halo columns starting at element (t+1)*tl
    w1_ref: (Cmid_p, K1*Cin_p)    conv1 weights, taps folded into contraction
    b1_ref: (Cmid_p, 1)           f32
    w2_ref: (Cout_p, K2*Cmid_p)
    b2_ref: (Cout_p, 1)
    o_ref : (1, Cout_p, tl)       f32, lane-dense output tile
    """
    t = pl.program_id(1)
    h1 = tl + k2 - 1            # conv1 output columns needed (incl. conv2 halo)
    halo = k1 + k2 - 2          # extra input columns beyond the tl-wide tile

    x_main = x_ref[0]                                            # (Cin_p, tl) bf16
    if halo > 0:
        xin = jnp.concatenate([x_main, xh_ref[0, :, :halo]], axis=-1)
    else:
        xin = x_main                                             # (Cin_p, tl+halo)

    # ---- stage 1: single MXU dot, contraction = K1*Cin_p ----
    if k1 > 1:
        xs = jnp.concatenate([xin[:, kk:kk + h1] for kk in range(k1)], axis=0)
    else:
        xs = xin[:, :h1]                                         # (K1*Cin_p, h1)
    y1 = jnp.dot(w1_ref[...], xs, preferred_element_type=jnp.float32)
    y1 = y1 + b1_ref[...]
    y1 = jnp.maximum(y1, slope * y1)                             # LeakyReLU(0.2)
    # Columns outside conv1's valid range are conv2's zero padding -> force 0.
    g = t * tl - p2 + lax.broadcasted_iota(jnp.int32, (1, h1), 1)
    y1 = jnp.where((g >= 0) & (g < lout1), y1, 0.0).astype(jnp.bfloat16)

    # ---- stage 2: single MXU dot, contraction = K2*Cmid_p ----
    if k2 > 1:
        ys = jnp.concatenate([y1[:, kk:kk + tl] for kk in range(k2)], axis=0)
    else:
        ys = y1                                                  # (K2*Cmid_p, tl)
    out = jnp.dot(w2_ref[...], ys, preferred_element_type=jnp.float32) + b2_ref[...]
    o_ref[0] = jnp.maximum(out, slope * out).astype(o_ref.dtype)


def convblock_forward(x, w1, b1, w2, b2, p1, p2, *, slope=0.2, max_tile=4096):
    """x: (B, Cin, L); w1: (Cmid, Cin, K1); w2: (Cout, Cmid, K2) [torch layout]."""
    B, cin, L = x.shape
    cmid, cin_w, k1 = w1.shape
    cout, cmid_w, k2 = w2.shape
    assert cin_w == cin and cmid_w == cmid
    lout1 = L + 2 * p1 - k1 + 1
    lout2 = lout1 + 2 * p2 - k2 + 1
    assert lout1 >= 1 and lout2 >= 1

    # Pad channels to multiples of 8 so (C, L) vregs are sublane-dense.
    cin_p, cmid_p, cout_p = (_round_up(c, 8) for c in (cin, cmid, cout))
    halo = k1 + k2 - 2
    halo_blk = max(128, _round_up(halo, 128))

    vmem_cap = _tpu_vmem_capacity()
    tl, lpad, nt = _choose_tile(lout2, cin_p, cmid_p, cout_p, k1, k2, B,
                                halo_blk, max_tile, vmem_cap)
    lxp = lpad + halo_blk                      # padded input length

    # One pad pass: zero pad channels + both convs' zero padding (p1+p2) on the
    # left, and enough on the right for every tile's main+halo window.
    xp = jnp.pad(x, ((0, 0), (0, cin_p - cin),
                     (p1 + p2, lxp - L - (p1 + p2)))).astype(jnp.bfloat16)

    # Weights: pad channels, fold taps into the contraction dim (tap-major).
    w1p = jnp.pad(w1, ((0, cmid_p - cmid), (0, cin_p - cin), (0, 0)))
    w1f = jnp.transpose(w1p, (0, 2, 1)).reshape(cmid_p, k1 * cin_p).astype(jnp.bfloat16)
    w2p = jnp.pad(w2, ((0, cout_p - cout), (0, cmid_p - cmid), (0, 0)))
    w2f = jnp.transpose(w2p, (0, 2, 1)).reshape(cout_p, k2 * cmid_p).astype(jnp.bfloat16)
    b1r = jnp.pad(b1, (0, cmid_p - cmid)).reshape(cmid_p, 1).astype(jnp.float32)
    b2r = jnp.pad(b2, (0, cout_p - cout)).reshape(cout_p, 1).astype(jnp.float32)

    kernel = partial(_fused_convblock_kernel, k1=k1, k2=k2, p2=p2,
                     lout1=lout1, tl=tl, slope=slope)

    q = tl // halo_blk                         # tl is a multiple of halo_blk
    vmem_limit = int(min(vmem_cap * 3 // 4, 100 << 20))

    out = pl.pallas_call(
        kernel,
        out_shape=jax.ShapeDtypeStruct((B, cout_p, lpad), jnp.float32),
        grid=(B, nt),
        in_specs=[
            pl.BlockSpec((1, cin_p, tl), lambda b, t: (b, 0, t)),
            pl.BlockSpec((1, cin_p, halo_blk), lambda b, t: (b, 0, (t + 1) * q)),
            pl.BlockSpec((cmid_p, k1 * cin_p), lambda b, t: (0, 0)),
            pl.BlockSpec((cmid_p, 1), lambda b, t: (0, 0)),
            pl.BlockSpec((cout_p, k2 * cmid_p), lambda b, t: (0, 0)),
            pl.BlockSpec((cout_p, 1), lambda b, t: (0, 0)),
        ],
        out_specs=pl.BlockSpec((1, cout_p, tl), lambda b, t: (b, 0, t)),
        compiler_params=pltpu.CompilerParams(
            dimension_semantics=("parallel", "parallel"),
            vmem_limit_bytes=vmem_limit),
    )(xp, xp, w1f, b1r, w2f, b2r)

    return out[:, :cout, :lout2]


def init_conv_params(key, in_ch, out_ch, ksize):
    """Deterministic PyTorch-style (kaiming-uniform-ish) Conv1d init."""
    kw, kb = jax.random.split(key)
    bound = 1.0 / math.sqrt(in_ch * ksize)
    w = jax.random.uniform(kw, (out_ch, in_ch, ksize), jnp.float32, -bound, bound)
    b = jax.random.uniform(kb, (out_ch,), jnp.float32, -bound, bound)
    return w, b


class ConvBlock:
    """Pallas equivalent of ProGAN ConvBlock; both conv+LeakyReLU stages are
    fused into a single pallas_call (the intermediate never leaves VMEM)."""

    def __init__(self, key, in_channel, out_channel,
                 kernel_size1, padding1, kernel_size2, padding2):
        ka, kb = jax.random.split(key)
        self.w1, self.b1 = init_conv_params(ka, in_channel, out_channel, kernel_size1)
        self.w2, self.b2 = init_conv_params(kb, out_channel, out_channel, kernel_size2)
        self.p1, self.p2 = padding1, padding2

    def __call__(self, x, *, max_tile=4096):
        return convblock_forward(x, self.w1, self.b1, self.w2, self.b2,
                                 self.p1, self.p2, max_tile=max_tile)


def _reference(x, block, *, quantize=False):
    """Pure-JAX reference. quantize=True mirrors the kernel's bf16 operands
    (weights/activations cast to bf16, f32 accumulation) for a tight check."""
    q = (lambda a: a.astype(jnp.bfloat16).astype(jnp.float32)) if quantize else (lambda a: a)

    def conv(inp, w, b, p):
        y = lax.conv_general_dilated(
            q(inp), q(w), window_strides=(1,), padding=[(p, p)],
            dimension_numbers=("NCH", "OIH", "NCH"),
            precision=lax.Precision.HIGHEST)
        y = y + b[None, :, None]
        return jnp.where(y > 0, y, 0.2 * y)

    y = conv(x, block.w1, block.b1, block.p1)
    return conv(y, block.w2, block.b2, block.p2)


if __name__ == "__main__":
    key = jax.random.PRNGKey(0)
    kx1, kp1, kx2, kp2 = jax.random.split(key, 4)

    # Test 1: small shapes consistent with the module (batch=2, in_ch=4, out_ch=8, L=16).
    B, C_IN, C_OUT, L = 2, 4, 8, 16
    x = jax.random.normal(kx1, (B, C_IN, L), jnp.float32)
    block = ConvBlock(kp1, C_IN, C_OUT, kernel_size1=3, padding1=1,
                      kernel_size2=3, padding2=1)
    out = jax.block_until_ready(block(x))
    ref_q = _reference(x, block, quantize=True)    # bf16-operand reference (tight)
    ref_f = _reference(x, block, quantize=False)   # full f32 reference (loose)
    assert out.shape == ref_f.shape == (B, C_OUT, L)
    assert jnp.allclose(out, ref_q, atol=1e-3, rtol=1e-3)
    rel = float(jnp.linalg.norm(out - ref_f) / (jnp.linalg.norm(ref_f) + 1e-6))
    assert rel < 0.05, rel   # bf16 operand quantization allowance

    # Test 2: longer sequence + asymmetric kernel sizes, forcing multiple L tiles
    # (exercises halo reads and the conv2 zero-pad masking across tiles).
    L2 = 300
    x2 = jax.random.normal(kx2, (B, C_IN, L2), jnp.float32)
    block2 = ConvBlock(kp2, C_IN, C_OUT, kernel_size1=5, padding1=2,
                       kernel_size2=3, padding2=1)
    out2 = jax.block_until_ready(block2(x2, max_tile=128))
    ref2_q = _reference(x2, block2, quantize=True)
    assert out2.shape == ref2_q.shape == (B, C_OUT, L2)
    assert jnp.allclose(out2, ref2_q, atol=1e-3, rtol=1e-3)

    print("KERNEL_OK")
</pallas_src>

<mosaic_0001>
module attributes {stable_mosaic.version = 11 : i64} {
  func.func @_fused_convblock_kernel(%arg0: i32, %arg1: i32, %arg2: memref<1x8x128xbf16, #tpu.memory_space<vmem>>, %arg3: memref<1x8x128xbf16, #tpu.memory_space<vmem>>, %arg4: memref<8x24xbf16, #tpu.memory_space<vmem>>, %arg5: memref<8x1xf32, #tpu.memory_space<vmem>>, %arg6: memref<8x24xbf16, #tpu.memory_space<vmem>>, %arg7: memref<8x1xf32, #tpu.memory_space<vmem>>, %arg8: memref<1x8x128xf32, #tpu.memory_space<vmem>>) attributes {dimension_semantics = [#tpu.dimension_semantics<parallel>, #tpu.dimension_semantics<parallel>], iteration_bounds = array<i64: 2, 1>, scalar_prefetch = 0 : i64, scratch_operands = 0 : i64, tpu.core_type = #tpu.core_type<tc>, window_params = [{transform_indices = @transform_0, window_bounds = array<i64: 1, 8, 128>}, {transform_indices = @transform_1, window_bounds = array<i64: 1, 8, 128>}, {pipeline_mode = #tpu.pipeline_mode<synchronous>, transform_indices = @transform_2, window_bounds = array<i64: 8, 24>}, {pipeline_mode = #tpu.pipeline_mode<synchronous>, transform_indices = @transform_3, window_bounds = array<i64: 8, 1>}, {pipeline_mode = #tpu.pipeline_mode<synchronous>, transform_indices = @transform_4, window_bounds = array<i64: 8, 24>}, {pipeline_mode = #tpu.pipeline_mode<synchronous>, transform_indices = @transform_5, window_bounds = array<i64: 8, 1>}, {transform_indices = @transform_6, window_bounds = array<i64: 1, 8, 128>}]} {
    %c0 = arith.constant 0 : index
    %c0_0 = arith.constant 0 : index
    %c0_1 = arith.constant 0 : index
    %0 = vector.load %arg2[%c0, %c0_0, %c0_1] : memref<1x8x128xbf16, #tpu.memory_space<vmem>>, vector<1x8x128xbf16>
    %1 = vector.shape_cast %0 : vector<1x8x128xbf16> to vector<8x128xbf16>
    %c0_2 = arith.constant 0 : index
    %c0_3 = arith.constant 0 : index
    %c0_4 = arith.constant 0 : index
    %2 = vector.load %arg3[%c0_2, %c0_3, %c0_4] : memref<1x8x128xbf16, #tpu.memory_space<vmem>>, vector<1x8x4xbf16>
    %3 = vector.shape_cast %2 : vector<1x8x4xbf16> to vector<8x4xbf16>
    %4 = tpu.concatenate %1, %3 in 1 : vector<8x128xbf16>, vector<8x4xbf16> -> vector<8x132xbf16>
    %5 = vector.extract_strided_slice %4 {offsets = [0, 0], sizes = [8, 130], strides = [1, 1]} : vector<8x132xbf16> to vector<8x130xbf16>
    %6 = vector.extract_strided_slice %4 {offsets = [0, 1], sizes = [8, 130], strides = [1, 1]} : vector<8x132xbf16> to vector<8x130xbf16>
    %7 = vector.extract_strided_slice %4 {offsets = [0, 2], sizes = [8, 130], strides = [1, 1]} : vector<8x132xbf16> to vector<8x130xbf16>
    %8 = tpu.concatenate %5, %6, %7 in 0 : vector<8x130xbf16>, vector<8x130xbf16>, vector<8x130xbf16> -> vector<24x130xbf16>
    %c0_5 = arith.constant 0 : index
    %c0_6 = arith.constant 0 : index
    %9 = vector.load %arg4[%c0_5, %c0_6] : memref<8x24xbf16, #tpu.memory_space<vmem>>, vector<8x24xbf16>
    %cst = arith.constant dense<0.000000e+00> : vector<8x130xf32>
    %10 = tpu.matmul %9, %8, %cst {dimension_numbers = #tpu.dot_dimension_numbers<[1], [0], [0], [1], [0, 0, 1, 1], [], []>} : vector<8x24xbf16>, vector<24x130xbf16>, vector<8x130xf32> -> vector<8x130xf32>
    %c0_7 = arith.constant 0 : index
    %c0_8 = arith.constant 0 : index
    %11 = vector.load %arg5[%c0_7, %c0_8] : memref<8x1xf32, #tpu.memory_space<vmem>>, vector<8x1xf32>
    %12 = vector.broadcast %11 : vector<8x1xf32> to vector<8x130xf32>
    %13 = arith.addf %10, %12 : vector<8x130xf32>
    %cst_9 = arith.constant 2.000000e-01 : f32
    %14 = vector.broadcast %cst_9 : f32 to vector<8x130xf32>
    %15 = arith.mulf %14, %13 : vector<8x130xf32>
    %16 = arith.maximumf %13, %15 : vector<8x130xf32>
    %c128_i32 = arith.constant 128 : i32
    %17 = arith.muli %arg1, %c128_i32 : i32
    %c1_i32 = arith.constant 1 : i32
    %18 = arith.subi %17, %c1_i32 : i32
    %19 = tpu.iota {dimensions = array<i32: 1>} : vector<1x130xi32>
    %20 = vector.broadcast %18 : i32 to vector<1x130xi32>
    %21 = arith.addi %20, %19 : vector<1x130xi32>
    %c0_i32 = arith.constant 0 : i32
    %22 = vector.broadcast %c0_i32 : i32 to vector<1x130xi32>
    %23 = arith.cmpi sge, %21, %22 : vector<1x130xi32>
    %c16_i32 = arith.constant 16 : i32
    %24 = vector.broadcast %c16_i32 : i32 to vector<1x130xi32>
    %25 = arith.cmpi slt, %21, %24 : vector<1x130xi32>
    %26 = arith.andi %23, %25 : vector<1x130xi1>
    %cst_10 = arith.constant 0.000000e+00 : f32
    %27 = vector.shape_cast %26 : vector<1x130xi1> to vector<1x130xi1>
    %28 = vector.broadcast %27 : vector<1x130xi1> to vector<8x130xi1>
    %29 = vector.broadcast %cst_10 : f32 to vector<8x130xf32>
    %30 = arith.select %28, %16, %29 : vector<8x130xi1>, vector<8x130xf32>
    %31 = arith.truncf %30 : vector<8x130xf32> to vector<8x130xbf16>
    %32 = vector.extract_strided_slice %31 {offsets = [0, 0], sizes = [8, 128], strides = [1, 1]} : vector<8x130xbf16> to vector<8x128xbf16>
    %33 = vector.extract_strided_slice %31 {offsets = [0, 1], sizes = [8, 128], strides = [1, 1]} : vector<8x130xbf16> to vector<8x128xbf16>
    %34 = vector.extract_strided_slice %31 {offsets = [0, 2], sizes = [8, 128], strides = [1, 1]} : vector<8x130xbf16> to vector<8x128xbf16>
    %35 = tpu.concatenate %32, %33, %34 in 0 : vector<8x128xbf16>, vector<8x128xbf16>, vector<8x128xbf16> -> vector<24x128xbf16>
    %c0_11 = arith.constant 0 : index
    %c0_12 = arith.constant 0 : index
    %36 = vector.load %arg6[%c0_11, %c0_12] : memref<8x24xbf16, #tpu.memory_space<vmem>>, vector<8x24xbf16>
    %cst_13 = arith.constant dense<0.000000e+00> : vector<8x128xf32>
    %37 = tpu.matmul %36, %35, %cst_13 {dimension_numbers = #tpu.dot_dimension_numbers<[1], [0], [0], [1], [0, 0, 1, 1], [], []>} : vector<8x24xbf16>, vector<24x128xbf16>, vector<8x128xf32> -> vector<8x128xf32>
    %c0_14 = arith.constant 0 : index
    %c0_15 = arith.constant 0 : index
    %38 = vector.load %arg7[%c0_14, %c0_15] : memref<8x1xf32, #tpu.memory_space<vmem>>, vector<8x1xf32>
    %39 = vector.broadcast %38 : vector<8x1xf32> to vector<8x128xf32>
    %40 = arith.addf %37, %39 : vector<8x128xf32>
    %cst_16 = arith.constant 2.000000e-01 : f32
    %41 = vector.broadcast %cst_16 : f32 to vector<8x128xf32>
    %42 = arith.mulf %41, %40 : vector<8x128xf32>
    %43 = arith.maximumf %40, %42 : vector<8x128xf32>
    %c0_17 = arith.constant 0 : index
    %c0_18 = arith.constant 0 : index
    %c0_19 = arith.constant 0 : index
    %44 = vector.load %arg8[%c0_17, %c0_18, %c0_19] : memref<1x8x128xf32, #tpu.memory_space<vmem>>, vector<1x8x128xf32>
    %45 = vector.shape_cast %44 : vector<1x8x128xf32> to vector<8x128xf32>
    %46 = vector.shape_cast %43 : vector<8x128xf32> to vector<1x8x128xf32>
    tpu.vector_store %arg8[%c0_17, %c0_18, %c0_19], %46 {strides = array<i32>} : memref<1x8x128xf32, #tpu.memory_space<vmem>>, vector<1x8x128xf32>,
    return
  }
  func.func @transform_0(%arg0: i32, %arg1: i32) -> (i32, i32, i32) {
    %c0_i32 = arith.constant 0 : i32
    %c0_i32_0 = arith.constant 0 : i32
    return %arg0, %c0_i32, %arg1 : i32, i32, i32
  }
  func.func @transform_1(%arg0: i32, %arg1: i32) -> (i32, i32, i32) {
    %c1_i32 = arith.constant 1 : i32
    %0 = arith.addi %arg1, %c1_i32 : i32
    %c1_i32_0 = arith.constant 1 : i32
    %1 = arith.muli %0, %c1_i32_0 : i32
    %c0_i32 = arith.constant 0 : i32
    %c0_i32_1 = arith.constant 0 : i32
    return %arg0, %c0_i32, %1 : i32, i32, i32
  }
  func.func @transform_2(%arg0: i32, %arg1: i32) -> (i32, i32) {
    %c0_i32 = arith.constant 0 : i32
    %c0_i32_0 = arith.constant 0 : i32
    %c0_i32_1 = arith.constant 0 : i32
    return %c0_i32, %c0_i32_0 : i32, i32
  }
  func.func @transform_3(%arg0: i32, %arg1: i32) -> (i32, i32) {
    %c0_i32 = arith.constant 0 : i32
    %c0_i32_0 = arith.constant 0 : i32
    %c0_i32_1 = arith.constant 0 : i32
    return %c0_i32, %c0_i32_0 : i32, i32
  }
  func.func @transform_4(%arg0: i32, %arg1: i32) -> (i32, i32) {
    %c0_i32 = arith.constant 0 : i32
    %c0_i32_0 = arith.constant 0 : i32
    %c0_i32_1 = arith.constant 0 : i32
    return %c0_i32, %c0_i32_0 : i32, i32
  }
  func.func @transform_5(%arg0: i32, %arg1: i32) -> (i32, i32) {
    %c0_i32 = arith.constant 0 : i32
    %c0_i32_0 = arith.constant 0 : i32
    %c0_i32_1 = arith.constant 0 : i32
    return %c0_i32, %c0_i32_0 : i32, i32
  }
  func.func @transform_6(%arg0: i32, %arg1: i32) -> (i32, i32, i32) {
    %c0_i32 = arith.constant 0 : i32
    %c0_i32_0 = arith.constant 0 : i32
    return %arg0, %c0_i32, %arg1 : i32, i32, i32
  }
}

</mosaic_0001>

<llo_original>
// kernel: tpu_custom_call.1
$region0: #{tpu_custom_call.1}
  #allocation0 [shape = 'u32[]', space=smem, size = 0x4, offset = 0x4, fixed_abs, tag = 'smem constant byte address 0x4 - core index']
  #allocation1 [shape = 'u32[144,128]{1,0:T(1,128)}', space=vmem, size = 0x12000, scoped, tag = 'internal scratch']
  %s0 = inlined_call_operand.vmem [shape: bf16[2,8,256], index: 0, kind: input, shape index: {}]
  %s1 = inlined_call_operand.hbm [shape: bf16[2,8,256], index: 1, kind: input, shape index: {}]
  %s2 = inlined_call_operand.vmem [shape: bf16[8,24], index: 2, kind: input, shape index: {}]
  %s3 = inlined_call_operand.vmem [shape: f32[8,1], index: 3, kind: input, shape index: {}]
  %s4 = inlined_call_operand.vmem [shape: bf16[8,24], index: 4, kind: input, shape index: {}]
  %s5 = inlined_call_operand.vmem [shape: f32[8,1], index: 5, kind: input, shape index: {}]
  %s6 = inlined_call_operand.hbm [shape: f32[2,8,128], index: 6, kind: output, shape index: {}]
  %s7 = sld [smem:[#allocation0]]
  $region61: #{tpu_custom_call.1} parent=0
    _
  %s9 = ssub.s32 1, %s7
  %s10 = scalar_select 0, %s9, %s7
  $region1: #{tpu_custom_call.1} parent=0
    #allocation2 [shape = 'u8[4096]{0}', space=vmem, size = 0x1000, scoped, tag = 'input window, operand 1']
    #allocation3 [shape = 's32[2]{0}', space=sflag, size = 0x8, scoped, tag = 'scoped memory for tpu_custom_call.1']
    #allocation4 [shape = 's32[2]{0}', space=sflag, size = 0x8, scoped, tag = 'scoped memory for tpu_custom_call.1']
    #allocation5 [shape = 'u8[8192]{0}', space=vmem, size = 0x2000, scoped, tag = 'output window, operand 0']
    %11 = vsyncpa [#allocation3], 0
    %s12 = scalar_lea.sflag [#allocation3], 1
    %13 = vsyncpa %s12, 0
    %14 = vsyncpa [#allocation4], 0
    %s15 = scalar_lea.sflag [#allocation4], 1
    %16 = vsyncpa %s15, 0
    loop: start=0, step=1, limit=4
    $region2: #{tpu_custom_call.1} parent=1 // loop_pre_header
      _
    $region3: #{tpu_custom_call.1} parent=1 // loop_header
      %s18 = sphi 0, %s22
      %p19 = scmp.ge.s32.totalorder %s18, 4
      %s25 = sphi 0, %s37
      %s26 = sphi 0, %s33
      %s27 = sphi 0, %s25
      %s28 = sphi 0, %s26
      %s29 = sphi 0, %s27
      %s30 = sphi 0, %s28
      %s42 = sphi 0, %s44
      %s45 = sphi 0, %s42
      %s46 = sphi 0, %s45
      %s62 = sphi 0, %s46
      %s72 = sphi 0, %s74
      %s75 = sphi 0, %s72
      %s76 = sphi 0, %s75
      %s92 = sphi 0, %s76
      %s96 = sphi 0, %s96
      %s98 = sphi 0, %s96
      %s99 = sphi 0, %s98
      %s113 = sphi 0, %s99
      %s117 = sphi 0, %s117
      %s119 = sphi 0, %s117
      %s120 = sphi 0, %s119
      %s134 = sphi 0, %s120
      %s138 = sphi 0, %s138
      %s140 = sphi 0, %s138
      %s141 = sphi 0, %s140
      %s155 = sphi 0, %s141
      %s159 = sphi 0, %s159
      %s161 = sphi 0, %s159
      %s162 = sphi 0, %s161
      %s176 = sphi 0, %s162
      %s184 = sphi 0, %s186
      %s187 = sphi 0, %s184
      %s188 = sphi 0, %s187
      %s204 = sphi 0, %s188
    $region4: #{tpu_custom_call.1} parent=1 // loop_header_branch
      %21 = sbr.rel (%p19) target = $region8
    $region5: #{tpu_custom_call.1} parent=1 // loop_body
      %s23 = ssub.s32 %s18, 1
      %s24 = ssub.s32 %s18, 2
      %s31 = sadd.s32 1, %s26
      %p32 = scmp.ge.s32.totalorder %s31, 1
      %s33 = scalar_select %p32, 0, %s31
      %s34 = sadd.s32 1, %s25
      %s35 = scalar_select %p32, %s34, %s25
      %p36 = scmp.ge.s32.totalorder %s35, 2
      %s37 = scalar_select %p36, 0, %s35
      %s38 = ssub.s32 %s25, %s37
      %s39 = ssub.s32 %s26, %s33
      %s40 = sor.u32 %s38, %s39
      %p41 = scmp.eq.s32.totalorder %s40, 0
      %s43 = sadd.s32 %s42, 1
      %s44 = scalar_select %p41, %s42, %s43
      %p47 = pneg %p41
      %p48 = scmp.eq.s32.totalorder %s18, 1
      %p49 = por %p47, %p48
      %p50 = scmp.ne.s32.totalorder %s42, %s45
      %p51 = scmp.eq.s32.totalorder %s18, 0
      %p52 = por %p50, %p51
      %p53 = scmp.ne.s32.totalorder %s42, %s45
      %p54 = scmp.eq.s32.totalorder %s23, 1
      %p55 = por %p53, %p54
      %p56 = scmp.ne.s32.totalorder %s45, %s46
      %p57 = scmp.eq.s32.totalorder %s23, 0
      %p58 = por %p56, %p57
      %p59 = scmp.ne.s32.totalorder %s45, %s46
      %p60 = scmp.eq.s32.totalorder %s24, 1
      %p61 = por %p59, %p60
      %p63 = scmp.ne.s32.totalorder %s46, %s62
      %p64 = scmp.eq.s32.totalorder %s24, 0
      %p65 = por %p63, %p64
      %s66 = sadd.s32 %s26, 1
      %s67 = sadd.s32 %s33, 1
      %s68 = ssub.s32 %s25, %s37
      %s69 = ssub.s32 %s66, %s67
      %s70 = sor.u32 %s68, %s69
      %p71 = scmp.eq.s32.totalorder %s70, 0
      %s73 = sadd.s32 %s72, 1
      %s74 = scalar_select %p71, %s72, %s73
      %p77 = pneg %p71
      %p78 = scmp.eq.s32.totalorder %s18, 1
      %p79 = por %p77, %p78
      %p80 = scmp.ne.s32.totalorder %s72, %s75
      %p81 = scmp.eq.s32.totalorder %s18, 0
      %p82 = por %p80, %p81
      %p83 = scmp.ne.s32.totalorder %s72, %s75
      %p84 = scmp.eq.s32.totalorder %s23, 1
      %p85 = por %p83, %p84
      %p86 = scmp.ne.s32.totalorder %s75, %s76
      %p87 = scmp.eq.s32.totalorder %s23, 0
      %p88 = por %p86, %p87
      %p89 = scmp.ne.s32.totalorder %s75, %s76
      %p90 = scmp.eq.s32.totalorder %s24, 1
      %p91 = por %p89, %p90
      %p93 = scmp.ne.s32.totalorder %s76, %s92
      %p94 = scmp.eq.s32.totalorder %s24, 0
      %p95 = por %p93, %p94
      %s97 = sadd.s32 %s96, 1
      %p100 = scmp.eq.s32.totalorder %s18, 1
      %p101 = scmp.ne.s32.totalorder %s96, %s98
      %p102 = scmp.eq.s32.totalorder %s18, 0
      %p103 = por %p101, %p102
      %p104 = scmp.ne.s32.totalorder %s96, %s98
      %p105 = scmp.eq.s32.totalorder %s23, 1
      %p106 = por %p104, %p105
      %p107 = scmp.ne.s32.totalorder %s98, %s99
      %p108 = scmp.eq.s32.totalorder %s23, 0
      %p109 = por %p107, %p108
      %p110 = scmp.ne.s32.totalorder %s98, %s99
      %p111 = scmp.eq.s32.totalorder %s24, 1
      %p112 = por %p110, %p111
      %p114 = scmp.ne.s32.totalorder %s99, %s113
      %p115 = scmp.eq.s32.totalorder %s24, 0
      %p116 = por %p114, %p115
      %s118 = sadd.s32 %s117, 1
      %p121 = scmp.eq.s32.totalorder %s18, 1
      %p122 = scmp.ne.s32.totalorder %s117, %s119
      %p123 = scmp.eq.s32.totalorder %s18, 0
      %p124 = por %p122, %p123
      %p125 = scmp.ne.s32.totalorder %s117, %s119
      %p126 = scmp.eq.s32.totalorder %s23, 1
      %p127 = por %p125, %p126
      %p128 = scmp.ne.s32.totalorder %s119, %s120
      %p129 = scmp.eq.s32.totalorder %s23, 0
      %p130 = por %p128, %p129
      %p131 = scmp.ne.s32.totalorder %s119, %s120
      %p132 = scmp.eq.s32.totalorder %s24, 1
      %p133 = por %p131, %p132
      %p135 = scmp.ne.s32.totalorder %s120, %s134
      %p136 = scmp.eq.s32.totalorder %s24, 0
      %p137 = por %p135, %p136
      %s139 = sadd.s32 %s138, 1
      %p142 = scmp.eq.s32.totalorder %s18, 1
      %p143 = scmp.ne.s32.totalorder %s138, %s140
      %p144 = scmp.eq.s32.totalorder %s18, 0
      %p145 = por %p143, %p144
      %p146 = scmp.ne.s32.totalorder %s138, %s140
      %p147 = scmp.eq.s32.totalorder %s23, 1
      %p148 = por %p146, %p147
      %p149 = scmp.ne.s32.totalorder %s140, %s141
      %p150 = scmp.eq.s32.totalorder %s23, 0
      %p151 = por %p149, %p150
      %p152 = scmp.ne.s32.totalorder %s140, %s141
      %p153 = scmp.eq.s32.totalorder %s24, 1
      %p154 = por %p152, %p153
      %p156 = scmp.ne.s32.totalorder %s141, %s155
      %p157 = scmp.eq.s32.totalorder %s24, 0
      %p158 = por %p156, %p157
      %s160 = sadd.s32 %s159, 1
      %p163 = scmp.eq.s32.totalorder %s18, 1
      %p164 = scmp.ne.s32.totalorder %s159, %s161
      %p165 = scmp.eq.s32.totalorder %s18, 0
      %p166 = por %p164, %p165
      %p167 = scmp.ne.s32.totalorder %s159, %s161
      %p168 = scmp.eq.s32.totalorder %s23, 1
      %p169 = por %p167, %p168
      %p170 = scmp.ne.s32.totalorder %s161, %s162
      %p171 = scmp.eq.s32.totalorder %s23, 0
      %p172 = por %p170, %p171
      %p173 = scmp.ne.s32.totalorder %s161, %s162
      %p174 = scmp.eq.s32.totalorder %s24, 1
      %p175 = por %p173, %p174
      %p177 = scmp.ne.s32.totalorder %s162, %s176
      %p178 = scmp.eq.s32.totalorder %s24, 0
      %p179 = por %p177, %p178
      %s180 = ssub.s32 %s25, %s37
      %s181 = ssub.s32 %s26, %s33
      %s182 = sor.u32 %s180, %s181
      %p183 = scmp.eq.s32.totalorder %s182, 0
      %s185 = sadd.s32 %s184, 1
      %s186 = scalar_select %p183, %s184, %s185
      %p189 = pneg %p183
      %p190 = scmp.eq.s32.totalorder %s18, 1
      %p191 = por %p189, %p190
      %p192 = scmp.ne.s32.totalorder %s184, %s187
      %p193 = scmp.eq.s32.totalorder %s18, 0
      %p194 = por %p192, %p193
      %p195 = scmp.ne.s32.totalorder %s184, %s187
      %p196 = scmp.eq.s32.totalorder %s23, 1
      %p197 = por %p195, %p196
      %p198 = scmp.ne.s32.totalorder %s187, %s188
      %p199 = scmp.eq.s32.totalorder %s23, 0
      %p200 = por %p198, %p199
      %p201 = scmp.ne.s32.totalorder %s187, %s188
      %p202 = scmp.eq.s32.totalorder %s24, 1
      %p203 = por %p201, %p202
      %p205 = scmp.ne.s32.totalorder %s188, %s204
      %p206 = scmp.eq.s32.totalorder %s24, 0
      %p207 = por %p205, %p206
      %p208 = scmp.le.s32.totalorder 1, %s18
      %p209 = scmp.lt.s32.totalorder %s18, 3
      %p210 = pnand %p208, %p209
      %p211 = pneg %p210
      // Predicated region
      $region9: #{tpu_custom_call.1} parent=5 // pred_check
        _
      $region10: #{tpu_custom_call.1} parent=5 // pred_check_branch
        %213 = sbr.rel (%p210) target = $region12
      $region11: #{tpu_custom_call.1} parent=5 // pred_region
        %s214 = ssub.s32 %s18, 1
        // Predicated region
        $region13: #{tpu_custom_call.1} parent=11 // pred_check
          %p215 = pneg %p109
        $region14: #{tpu_custom_call.1} parent=11 // pred_check_branch
          %217 = sbr.rel (%p215) target = $region16
        $region15: #{tpu_custom_call.1} parent=11 // pred_region
          _
        $region16: #{tpu_custom_call.1} parent=11 // pred_fallthru
          _
        // Predicated region
        $region17: #{tpu_custom_call.1} parent=11 // pred_check
          %p218 = pneg %p130
        $region18: #{tpu_custom_call.1} parent=11 // pred_check_branch
          %220 = sbr.rel (%p218) target = $region20
        $region19: #{tpu_custom_call.1} parent=11 // pred_region
          _
        $region20: #{tpu_custom_call.1} parent=11 // pred_fallthru
          _
        // Predicated region
        $region21: #{tpu_custom_call.1} parent=11 // pred_check
          %p221 = pneg %p151
        $region22: #{tpu_custom_call.1} parent=11 // pred_check_branch
          %223 = sbr.rel (%p221) target = $region24
        $region23: #{tpu_custom_call.1} parent=11 // pred_region
          _
        $region24: #{tpu_custom_call.1} parent=11 // pred_fallthru
          _
        // Predicated region
        $region25: #{tpu_custom_call.1} parent=11 // pred_check
          %p224 = pneg %p172
        $region26: #{tpu_custom_call.1} parent=11 // pred_check_branch
          %226 = sbr.rel (%p224) target = $region28
        $region27: #{tpu_custom_call.1} parent=11 // pred_region
          _
        $region28: #{tpu_custom_call.1} parent=11 // pred_fallthru
          _
      $region12: #{tpu_custom_call.1} parent=5 // pred_fallthru
        _
      %p227 = scmp.lt.s32.totalorder %s18, 2
      // Predicated region
      $region29: #{tpu_custom_call.1} parent=5 // pred_check
        %p228 = pneg %p227
      $region30: #{tpu_custom_call.1} parent=5 // pred_check_branch
        %230 = sbr.rel (%p228) target = $region32
      $region31: #{tpu_custom_call.1} parent=5 // pred_region
        // Predicated region
        $region33: #{tpu_custom_call.1} parent=31 // pred_check
          %p231 = pneg %p52
        $region34: #{tpu_custom_call.1} parent=31 // pred_check_branch
          %233 = sbr.rel (%p231) target = $region36
        $region35: #{tpu_custom_call.1} parent=31 // pred_region
          %p234 = scmp.lt.s32.totalorder %s25, 1
          %s235 = scalar_select %p234, %s25, 1
          %p236 = scmp.lt.s32.totalorder %s26, 1
          %s237 = scalar_select %p236, %s26, 1
          %s238 = smul.addr %s235, 2
          %s239 = sadd.s32 %s237, %s238
          %s240 = smul.addr %s239, 4
          %s241 = scalar_lea.vmem %s0, %s240
        $region36: #{tpu_custom_call.1} parent=31 // pred_fallthru
          _
        // Predicated region
        $region37: #{tpu_custom_call.1} parent=31 // pred_check
          %p242 = pneg %p82
        $region38: #{tpu_custom_call.1} parent=31 // pred_check_branch
          %244 = sbr.rel (%p242) target = $region40
        $region39: #{tpu_custom_call.1} parent=31 // pred_region
          %s245 = sand.u32 %s72, 1
          %s246 = scalar_lea.sflag [#allocation3], %s245
          %s247 = sand.u32 %s72, 1
          %s248 = smul.addr %s247, 4
          %s249 = scalar_lea.vmem [#allocation2], %s248
          %s250 = sadd.s32 %s26, 1
          %s252 = ssub.s32 64, 64
          %253 = vsyncadd %s246, %s252
          %s254 = smul.addr %s25, 2
          %s255 = sadd.s32 %s250, %s254
          %s256 = smul.addr %s255, 64
          %s257 = scalar_lea.hbm %s1, %s256
          %s259 = sshll.u32 %s249, 4
          %s260 = int_to_ptr.vmem [resolvable:$true] %s259
          %262 = dma.hbm_to_vmem [thread:$0]  %s257, 64, %s260, %s246
        $region40: #{tpu_custom_call.1} parent=31 // pred_fallthru
          _
      $region32: #{tpu_custom_call.1} parent=5 // pred_fallthru
        _
      %p263 = scmp.le.s32.totalorder 1, %s18
      %p264 = scmp.lt.s32.totalorder %s18, 3
      %p265 = pnand %p263, %p264
      %p266 = pneg %p265
      // Predicated region
      $region41: #{tpu_custom_call.1} parent=5 // pred_check
        _
      $region42: #{tpu_custom_call.1} parent=5 // pred_check_branch
        %268 = sbr.rel (%p265) target = $region44
      $region43: #{tpu_custom_call.1} parent=5 // pred_region
        %s269 = ssub.s32 %s18, 1
        %s270 = sand.u32 %s75, 1
        %s271 = scalar_lea.sflag [#allocation3], %s270
        %s272 = sand.u32 %s75, 1
        %s273 = smul.addr %s272, 4
        %s274 = scalar_lea.vmem [#allocation2], %s273
        // Predicated region
        $region45: #{tpu_custom_call.1} parent=43 // pred_check
          %p275 = pneg %p88
        $region46: #{tpu_custom_call.1} parent=43 // pred_check_branch
          %277 = sbr.rel (%p275) target = $region48
        $region47: #{tpu_custom_call.1} parent=43 // pred_region
          %278 = dma.done %s271, 64
        $region48: #{tpu_custom_call.1} parent=43 // pred_fallthru
          _
        %p279 = scmp.lt.s32.totalorder %s27, 1
        %s280 = scalar_select %p279, %s27, 1
        %p281 = scmp.lt.s32.totalorder %s28, 1
        %s282 = scalar_select %p281, %s28, 1
        %s283 = smul.addr %s280, 2
        %s284 = sadd.s32 %s282, %s283
        %s285 = smul.addr %s284, 4
        %s286 = scalar_lea.vmem %s0, %s285
        %p287 = pneg %p58
        %p288 = pneg %p55
        %s289 = sand.u32 %s75, 1
        %s290 = scalar_lea.sflag [#allocation3], %s289
        %s291 = sand.u32 %s75, 1
        %s292 = smul.addr %s291, 4
        %s293 = scalar_lea.vmem [#allocation2], %s292
        %p294 = pneg %p88
        %p295 = pneg %p85
        %p296 = pneg %p109
        %p297 = pneg %p106
        %p298 = pneg %p130
        %p299 = pneg %p127
        %p300 = pneg %p151
        %p301 = pneg %p148
        %p302 = pneg %p172
        %p303 = pneg %p169
        %p304 = pneg %p200
        %p305 = pneg %p197
        %s306 = sand.u32 %s187, 1
        %s307 = scalar_lea.sflag [#allocation4], %s306
        %s308 = sand.u32 %s187, 1
        %s309 = smul.addr %s308, 8
        %s310 = scalar_lea.vmem [#allocation5], %s309
        %p311 = scmp.lt.s32.totalorder %s27, 1
        %s312 = scalar_select %p311, %s27, 1
        %p313 = scmp.lt.s32.totalorder %s28, 1
        %s314 = scalar_select %p313, %s28, 1
        %s315 = smul.addr %s312, 2
        %s316 = sadd.s32 %s314, %s315
        %s317 = smul.addr %s316, 4
        %s318 = scalar_lea.vmem %s0, %s317
        %s319 = sadd.s32 %s28, 1
        %v321 = vld [vmem:[%s318] sm:$0xf]
        %v322 = vld [vmem:[%s274] sm:$0xf]
        %v325 = vrot.slane %v321, 4
        %v326 = vrot.slane %v322, 4
        %327 = vrot.lane.b32.xlu0 %v325, 127
        %v328 = vpop.permute.xlu0 %327
        %329 = vrot.lane.b32.xlu0 %v326, 127
        %v330 = vpop.permute.xlu0 %329
        %vm331 = vcmask 1039360
        %v332 = vsel %vm331, %v328, %v330
        %333 = vrot.lane.b32.xlu0 %v321, 126
        %v334 = vpop.permute.xlu0 %333
        %335 = vrot.lane.b32.xlu0 %v322, 126
        %v336 = vpop.permute.xlu0 %335
        %vm337 = vcmask 1031168
        %v338 = vsel %vm337, %v334, %v336
        %vm339 = vcmask 1043456
        %v342 = vsel %vm339, %v321, %v332
        %v346 = vsel %vm339, %v322, %v330
        %v348 = vld [vmem:[%s2] sm:$0xf]
        %v349 = vld [vmem:[%s3] sm:$0xff]
        %351 = vset.pattern.permute.xlu0 0
        %352 = vperm.xlu0 %351, %v349
        %v353 = vpop.permute.xlu0 %352
        %vm355 = vcmask 195584
        %v357 = vsel %vm355, %v348, 0
        %v360 = vsel %vm339, %v338, 0
        %v363 = vsel %vm339, %v336, 0
        %365 = vmatprep.subr.bf16.mxu0 %v346
        %366 = vmatpush1.bf16.msra.mxu0 %v342
        %367 = vmatprep.subr.bf16.mxu0 %v363
        %368 = vmatpush1.bf16.msra.mxu0 %v360
        %369 = vmatprep.subr.bf16.mxu0 0
        %370 = vmatpush1.bf16.msra.mxu0 0
        %371 = vmatprep.subr.bf16.mxu0 0
        %372 = vmatpush1.bf16.msra.mxu0 0
        %373 = vmatprep.subr.bf16.mxu0 0
        %374 = vmatpush1.bf16.msra.mxu0 0
        %375 = vmatprep.subr.bf16.mxu0 0
        %376 = vmatpush1.bf16.msra.mxu0 0
        %377 = vmatprep.subr.bf16.mxu0 0
        %378 = vmatpush1.bf16.msra.mxu0 0
        %379 = vmatprep.subr.bf16.mxu0 0
        %380 = vmatpush1.bf16.msra.mxu0 0
        %381 = vmatprep.subr.bf16.mxu0 0
        %382 = vmatpush1.bf16.msra.mxu0 0
        %383 = vmatprep.subr.bf16.mxu0 0
        %384 = vmatpush1.bf16.msra.mxu0 0
        %385 = vmatprep.subr.bf16.mxu0 0
        %386 = vmatpush1.bf16.msra.mxu0 0
        %387 = vmatprep.subr.bf16.mxu0 0
        %388 = vmatpush1.bf16.msra.mxu0 0
        %389 = vmatprep.subr.bf16.mxu0 0
        %390 = vmatpush1.bf16.msra.mxu0 0
        %391 = vmatprep.subr.bf16.mxu0 0
        %392 = vmatpush1.bf16.msra.mxu0 0
        %393 = vmatprep.subr.bf16.mxu0 0
        %394 = vmatpush1.bf16.msra.mxu0 0
        %395 = vmatprep.subr.bf16.mxu0 0
        %396 = vmatpush1.bf16.msra.mxu0 0
        %397 = vmatprep.mubr.bf16.mxu0 0
        %398 = vmatmul.mubr.bf16.gmra.mrb[0].mxu0 %v357
        %v399 = vpop.f32.mrb[0].mxu0
        %v400 = vadd.f32 %v353, %v399
        %v401 = vpop.f32.mrb[0].mxu0
        %v402 = vadd.f32 %v353, %v401
        %v403 = vpop.f32.mrb[0].mxu0
        %v404 = vpop.f32.mrb[0].mxu0
        %405 = vdwg.mxu0
        %v406 = vmul.f32 %v400, 0.2
        %v407 = vmul.f32 %v402, 0.2
        %v408 = vmax.f32 %v400, %v406
        %v409 = vmax.f32 %v402, %v407
        %s410 = smul.u32 %s28, 128
        %s411 = ssub.s32 %s410, 1
        %v412 = vlaneseq
        %v413 = vand.u32 %v412, 127
        %v414 = vadd.s32 %v413, 128
        %v415 = vstv %s411
        %v416 = vadd.s32 %v415, %v413
        %v417 = vadd.s32 %v415, %v414
        %vm418 = vcmp.ge.s32.totalorder %v416, 0
        %vm419 = vcmp.ge.s32.totalorder %v417, 0
        %vm420 = vcmp.lt.s32.totalorder %v416, 16
        %vm421 = vcmp.lt.s32.totalorder %v417, 16
        %vm422 = vmand %vm418, %vm420
        %vm423 = vmand %vm419, %vm421
        %v424 = vsel %vm422, 1, 0
        %v425 = vsel %vm423, 1, 0
        %vm426 = vcmp.eq.s32.totalorder %v424, 1
        %vm427 = vcmp.eq.s32.totalorder %v425, 1
        %v428 = vsel %vm426, %v408, 0.0
        %v429 = vsel %vm427, %v409, 0.0
        %v430 = vpack.c.bf16 %v428, %v428
        %v431 = vpack.c.bf16 %v429, %v429
        %v434 = vrot.slane %v430, 4
        %v435 = vrot.slane %v431, 4
        %436 = vrot.lane.b32.xlu0 %v434, 127
        %v437 = vpop.permute.xlu0 %436
        %438 = vrot.lane.b32.xlu0 %v435, 127
        %v439 = vpop.permute.xlu0 %438
        %v440 = vsel %vm331, %v437, %v439
        %441 = vrot.lane.b32.xlu0 %v430, 126
        %v442 = vpop.permute.xlu0 %441
        %443 = vrot.lane.b32.xlu0 %v431, 126
        %v444 = vpop.permute.xlu0 %443
        %v445 = vsel %vm337, %v442, %v444
        %v448 = vsel %vm339, %v430, %v440
        %v450 = vld [vmem:[%s4] sm:$0xf]
        %v451 = vld [vmem:[%s5] sm:$0xff]
        %453 = vset.pattern.permute.xlu0 0
        %454 = vperm.xlu0 %453, %v451
        %v455 = vpop.permute.xlu0 %454
        %v458 = vsel %vm355, %v450, 0
        %v461 = vsel %vm339, %v445, 0
        %463 = vmatprep.subr.bf16.mxu0 0
        %464 = vmatpush1.bf16.msra.mxu0 %v448
        %465 = vmatprep.subr.bf16.mxu0 0
        %466 = vmatpush1.bf16.msra.mxu0 %v461
        %467 = vmatprep.subr.bf16.mxu0 0
        %468 = vmatpush1.bf16.msra.mxu0 0
        %469 = vmatprep.subr.bf16.mxu0 0
        %470 = vmatpush1.bf16.msra.mxu0 0
        %471 = vmatprep.subr.bf16.mxu0 0
        %472 = vmatpush1.bf16.msra.mxu0 0
        %473 = vmatprep.subr.bf16.mxu0 0
        %474 = vmatpush1.bf16.msra.mxu0 0
        %475 = vmatprep.subr.bf16.mxu0 0
        %476 = vmatpush1.bf16.msra.mxu0 0
        %477 = vmatprep.subr.bf16.mxu0 0
        %478 = vmatpush1.bf16.msra.mxu0 0
        %479 = vmatprep.subr.bf16.mxu0 0
        %480 = vmatpush1.bf16.msra.mxu0 0
        %481 = vmatprep.subr.bf16.mxu0 0
        %482 = vmatpush1.bf16.msra.mxu0 0
        %483 = vmatprep.subr.bf16.mxu0 0
        %484 = vmatpush1.bf16.msra.mxu0 0
        %485 = vmatprep.subr.bf16.mxu0 0
        %486 = vmatpush1.bf16.msra.mxu0 0
        %487 = vmatprep.subr.bf16.mxu0 0
        %488 = vmatpush1.bf16.msra.mxu0 0
        %489 = vmatprep.subr.bf16.mxu0 0
        %490 = vmatpush1.bf16.msra.mxu0 0
        %491 = vmatprep.subr.bf16.mxu0 0
        %492 = vmatpush1.bf16.msra.mxu0 0
        %493 = vmatprep.subr.bf16.mxu0 0
        %494 = vmatpush1.bf16.msra.mxu0 0
        %495 = vmatprep.mubr.bf16.mxu0 0
        %496 = vmatmul.mubr.bf16.gmra.mrb[0].mxu0 %v458
        %v497 = vpop.f32.mrb[0].mxu0
        %v498 = vadd.f32 %v455, %v497
        %v499 = vpop.f32.mrb[0].mxu0
        %v500 = vpop.f32.mrb[0].mxu0
        %v501 = vpop.f32.mrb[0].mxu0
        %502 = vdwg.mxu0
        %v503 = vmul.f32 %v498, 0.2
        %v504 = vmax.f32 %v498, %v503
        %505 = vst [vmem:[%s310] sm:$0xff] %v504
        %s506 = sand.u32 %s187, 1
        %s507 = scalar_lea.sflag [#allocation4], %s506
        %s508 = sand.u32 %s187, 1
        %s509 = smul.addr %s508, 8
        %s510 = scalar_lea.vmem [#allocation5], %s509
        // Predicated region
        $region49: #{tpu_custom_call.1} parent=43 // pred_check
          %p511 = pneg %p197
        $region50: #{tpu_custom_call.1} parent=43 // pred_check_branch
          %513 = sbr.rel (%p511) target = $region52
        $region51: #{tpu_custom_call.1} parent=43 // pred_region
          %s515 = ssub.s32 128, 128
          %516 = vsyncadd %s507, %s515
          %s517 = sadd.s32 %s28, %s27
          %s518 = smul.addr %s517, 128
          %s519 = scalar_lea.hbm %s6, %s518
          %s521 = sshll.u32 %s510, 4
          %s522 = int_to_ptr.vmem [resolvable:$true] %s521
          %524 = dma.vmem_to_hbm [thread:$0]  %s522, 128, %s519, %s507
        $region52: #{tpu_custom_call.1} parent=43 // pred_fallthru
          _
      $region44: #{tpu_custom_call.1} parent=5 // pred_fallthru
        _
      %p525 = scmp.le.s32.totalorder 2, %s18
      // Predicated region
      $region53: #{tpu_custom_call.1} parent=5 // pred_check
        %p526 = pneg %p525
      $region54: #{tpu_custom_call.1} parent=5 // pred_check_branch
        %528 = sbr.rel (%p526) target = $region56
      $region55: #{tpu_custom_call.1} parent=5 // pred_region
        %s529 = ssub.s32 %s18, 2
        // Predicated region
        $region57: #{tpu_custom_call.1} parent=55 // pred_check
          %p530 = pneg %p203
        $region58: #{tpu_custom_call.1} parent=55 // pred_check_branch
          %532 = sbr.rel (%p530) target = $region60
        $region59: #{tpu_custom_call.1} parent=55 // pred_region
          %s533 = sand.u32 %s188, 1
          %s534 = scalar_lea.sflag [#allocation4], %s533
          %s535 = sand.u32 %s188, 1
          %s536 = smul.addr %s535, 8
          %s537 = scalar_lea.vmem [#allocation5], %s536
          %538 = dma.done %s534, 128
        $region60: #{tpu_custom_call.1} parent=55 // pred_fallthru
          _
      $region56: #{tpu_custom_call.1} parent=5 // pred_fallthru
        _
    $region6: #{tpu_custom_call.1} parent=1 // loop_footer
      %s22 = sadd.s32 1, %s18
    $region7: #{tpu_custom_call.1} parent=1 // loop_footer_branch
      %17 = sbr.rel target = $region3
    $region8: #{tpu_custom_call.1} parent=1 // loop_exit
      _
    %539 = vsyncpa [#allocation3], 1
    %s540 = scalar_lea.sflag [#allocation3], 1
    %541 = vsyncpa %s540, 1
    %542 = vsyncpa [#allocation4], 1
    %s543 = scalar_lea.sflag [#allocation4], 1
    %544 = vsyncpa %s543, 1

</llo_original>
